<compile_context>
chip_gen: v5e
topology: v5e:2x2
jax: 0.10.0
libtpu: 0.0.40
codegen_flags: <defaults>
</compile_context>

<pallas_src>
import jax
import jax.numpy as jnp
from jax import lax
from jax.experimental import pallas as pl
from jax.experimental.pallas import tpu as pltpu

NEG_VERY_LARGE = -1.0e7     # replace_masked_values(..., -10000000.0)
MASK_LOG_EPS = 1e-45        # allennlp masked_log_softmax epsilon (denormal ->
                            # flushed to 0 -> log gives -inf; kernel and
                            # reference use the same value so semantics match)


def _masked_log_softmax(logits, log_mask):
    # logits, log_mask: (Bb, L) f32.  NaN on a fully-masked *labelled* row,
    # exactly like the PyTorch/allennlp reference.
    shifted = logits + log_mask
    m = jnp.max(shifted, axis=-1, keepdims=True)
    lse = jnp.log(jnp.sum(jnp.exp(shifted - m), axis=-1, keepdims=True)) + m
    return shifted - lse


def _suffix_max(v):
    """suff[..., i] = max_{j >= i} v[..., j] via log2(L) shift-and-max steps."""
    L = v.shape[-1]
    out = v
    shift = 1
    while shift < L:
        pad = jnp.full(v.shape[:-1] + (shift,), -jnp.inf, dtype=v.dtype)
        shifted = jnp.concatenate([out[..., shift:], pad], axis=-1)
        out = jnp.maximum(out, shifted)
        shift *= 2
    return out


def single_span_head_kernel(x_ref, w_ref, b_ref, mask_ref, label_ref,
                            loss_ref, span_ref):
    Bb, L, D = x_ref.shape

    # --- fused Linear(D->1) x2 on the MXU: (Bb*L, D) @ (D, 2), f32 accumulate ---
    x2 = x_ref[...].reshape(Bb * L, D)
    logits2 = jnp.dot(x2, w_ref[...], preferred_element_type=jnp.float32)  # (Bb*L, 2)
    logits3 = logits2.reshape(Bb, L, 2)
    start_logits = logits3[:, :, 0] + b_ref[0, 0]     # (Bb, L) f32, bias from SMEM
    end_logits = logits3[:, :, 1] + b_ref[0, 1]       # (Bb, L) f32

    mask = mask_ref[0]      # (Bb, L) f32, 1.0 = keep, 0.0 = pad
    lbl = label_ref[0]      # (Bb, 2) i32

    # --- masked_log_softmax ---
    log_mask = jnp.log(mask + MASK_LOG_EPS)
    start_lp = _masked_log_softmax(start_logits, log_mask)
    end_lp = _masked_log_softmax(end_logits, log_mask)

    # --- replace_masked_values(logits, mask, -1e7) ---
    s_rep = jnp.where(mask > 0.5, start_logits, NEG_VERY_LARGE)   # (Bb, L)
    e_rep = jnp.where(mask > 0.5, end_logits, NEG_VERY_LARGE)     # (Bb, L)

    # --- get_best_span, O(L): upper-triangular argmax without (L, L) temporaries.
    # row max over j>=i is s_rep[i] + suffmax_e[i]; row-major first-occurrence
    # tie-break preserved by taking the minimum index among maxima.
    # (Tie-break can differ from the O(L^2) argmax only if float addition
    # collapses two distinct end logits onto the same sum — last-ulp event.)
    lane = lax.broadcasted_iota(jnp.int32, (Bb, L), 1)
    suff_e = _suffix_max(e_rep)                                   # (Bb, L)
    v = s_rep + suff_e
    best_val = jnp.max(v, axis=-1, keepdims=True)                 # (Bb, 1)
    best_start = jnp.min(jnp.where(v == best_val, lane, L),
                         axis=-1, keepdims=True)                  # (Bb, 1) i32
    target_e = jnp.max(jnp.where(lane == best_start, suff_e, -jnp.inf),
                       axis=-1, keepdims=True)                    # (Bb, 1)
    best_end = jnp.min(jnp.where((lane >= best_start) & (e_rep == target_e),
                                 lane, L),
                       axis=-1, keepdims=True)                    # (Bb, 1) i32
    span_ref[0] = (best_start * L + best_end).astype(jnp.int32)   # flat idx; decoded in wrapper

    # --- NLLLoss(reduction='sum'), restricted to rows whose label is not (-1,-1) ---
    # TODO(synk): PyTorch does a dynamic-shape boolean filter on label rows; a
    # masked per-row selection gives the identical loss value without dynamic shapes.
    s_sel = jnp.sum(jnp.where(lane == lbl[:, 0:1], start_lp, 0.0),
                    axis=-1, keepdims=True)                       # (Bb, 1)
    e_sel = jnp.sum(jnp.where(lane == lbl[:, 1:2], end_lp, 0.0),
                    axis=-1, keepdims=True)                       # (Bb, 1)
    loss_ref[0] = jnp.where(lbl[:, 0:1] != -1, -(s_sel + e_sel), 0.0)


def single_span_head(x, w_start, b_start, w_end, b_end, mask, label,
                     *, rows_per_block=8):
    B, L, D = x.shape
    Bb = min(rows_per_block, B)
    nb = -(-B // Bb)
    B_pad = nb * Bb
    if B_pad != B:
        pad = B_pad - B
        x = jnp.pad(x, ((0, pad), (0, 0), (0, 0)))                 # padded rows: mask=0
        mask = jnp.pad(mask, ((0, pad), (0, 0)))
        label = jnp.pad(label, ((0, pad), (0, 0)), constant_values=-1)

    # Fuse both heads: (D, 2) weight (x's native dtype for the MXU) + (1, 2) bias (SMEM).
    w2 = jnp.concatenate([w_start.reshape(D, 1), w_end.reshape(D, 1)],
                         axis=1).astype(x.dtype)
    bias2 = jnp.concatenate([b_start.reshape(1, 1), b_end.reshape(1, 1)],
                            axis=1).astype(jnp.float32)
    mask_f = mask.astype(jnp.float32).reshape(nb, Bb, L)
    label_i = label.astype(jnp.int32).reshape(nb, Bb, 2)

    # Explicit VMEM budget: double-buffered x block + a handful of (Bb, L) f32 temps.
    # TODO(synk): for very large L*D add a D-tiling grid axis instead of raising this.
    vmem_est = 2 * Bb * L * D * x.dtype.itemsize + 24 * Bb * L * 4 + (2 << 20)
    vmem_limit = int(min(48 << 20, max(16 << 20, vmem_est)))

    loss_rows, span_flat = pl.pallas_call(
        single_span_head_kernel,
        out_shape=(jax.ShapeDtypeStruct((nb, Bb, 1), jnp.float32),
                   jax.ShapeDtypeStruct((nb, Bb, 1), jnp.int32)),
        grid_spec=pltpu.PrefetchScalarGridSpec(
            num_scalar_prefetch=0,
            grid=(nb,),
            in_specs=[
                pl.BlockSpec((Bb, L, D), lambda i: (i, 0, 0)),               # x (native dtype)
                pl.BlockSpec((D, 2), lambda i: (0, 0)),                      # fused weights
                pl.BlockSpec(memory_space=pltpu.MemorySpace.SMEM),           # fused biases
                pl.BlockSpec((1, Bb, L), lambda i: (i, 0, 0)),               # mask
                pl.BlockSpec((1, Bb, 2), lambda i: (i, 0, 0)),               # label
            ],
            out_specs=(
                pl.BlockSpec((1, Bb, 1), lambda i: (i, 0, 0)),               # per-row loss
                pl.BlockSpec((1, Bb, 1), lambda i: (i, 0, 0)),               # flat best span
            ),
        ),
        compiler_params=pltpu.CompilerParams(
            dimension_semantics=("parallel",),
            vmem_limit_bytes=vmem_limit),
    )(x, w2, bias2, mask_f, label_i)

    loss = jnp.sum(loss_rows.reshape(-1)[:B])
    flat = span_flat.reshape(-1)[:B]
    best_span = jnp.stack([flat // L, flat % L], axis=-1).astype(jnp.int32)
    return loss, best_span


def reference_forward(x, w_start, b_start, w_end, b_end, mask, label):
    """Plain-JAX mirror of the PyTorch forward (for checking)."""
    mask_f = mask.astype(jnp.float32)
    start_logits = jnp.einsum("bld,d->bl", x, w_start[0]) + b_start[0, 0]
    end_logits = jnp.einsum("bld,d->bl", x, w_end[0]) + b_end[0, 0]

    def mls(v):
        return jax.nn.log_softmax(v + jnp.log(mask_f + MASK_LOG_EPS), axis=-1)

    start_lp, end_lp = mls(start_logits), mls(end_logits)
    s_rep = jnp.where(mask_f > 0.5, start_logits, NEG_VERY_LARGE)
    e_rep = jnp.where(mask_f > 0.5, end_logits, NEG_VERY_LARGE)
    B, L = s_rep.shape
    span = s_rep[:, :, None] + e_rep[:, None, :]
    tri = jnp.where(jnp.triu(jnp.ones((L, L))) > 0, 0.0, -jnp.inf)
    best = jnp.argmax((span + tri[None]).reshape(B, L * L), axis=-1)
    best_span = jnp.stack([best // L, best % L], axis=-1).astype(jnp.int32)
    row_ok = label[:, 0] != -1
    s_nll = start_lp[jnp.arange(B), label[:, 0]]
    e_nll = end_lp[jnp.arange(B), label[:, 1]]
    loss = -jnp.sum(jnp.where(row_ok, s_nll + e_nll, 0.0))
    return loss, best_span


if __name__ == "__main__":
    key = jax.random.PRNGKey(0)
    B, L, D = 2, 16, 32
    kx, kws, kbs, kwe, kbe = jax.random.split(key, 5)

    bound = 1.0 / (D ** 0.5)   # PyTorch nn.Linear default init range
    x = jax.random.normal(kx, (B, L, D), dtype=jnp.float32)
    w_start = jax.random.uniform(kws, (1, D), minval=-bound, maxval=bound, dtype=jnp.float32)
    b_start = jax.random.uniform(kbs, (1, 1), minval=-bound, maxval=bound, dtype=jnp.float32)
    w_end = jax.random.uniform(kwe, (1, D), minval=-bound, maxval=bound, dtype=jnp.float32)
    b_end = jax.random.uniform(kbe, (1, 1), minval=-bound, maxval=bound, dtype=jnp.float32)

    lengths = jnp.array([L, L - 4], dtype=jnp.int32)
    mask = (lax.broadcasted_iota(jnp.int32, (B, L), 1) < lengths[:, None]).astype(jnp.int32)
    # second row carries the (-1, -1) "no answer" label that the module filters out
    label = jnp.array([[3, 9], [-1, -1]], dtype=jnp.int32)

    loss, best_span = single_span_head(x, w_start, b_start, w_end, b_end, mask, label)
    loss = jax.block_until_ready(loss)
    best_span = jax.block_until_ready(best_span)

    ref_loss, ref_span = reference_forward(x, w_start, b_start, w_end, b_end, mask, label)
    assert jnp.allclose(loss, ref_loss, rtol=1e-4, atol=1e-4), (loss, ref_loss)
    assert jnp.array_equal(best_span, ref_span), (best_span, ref_span)

    print("KERNEL_OK")
</pallas_src>

<mosaic_0001>
module attributes {stable_mosaic.version = 11 : i64} {
  func.func @single_span_head_kernel(%arg0: i32, %arg1: memref<2x16x32xf32, #tpu.memory_space<vmem>>, %arg2: memref<32x2xf32, #tpu.memory_space<vmem>>, %arg3: memref<1x2xf32, #tpu.memory_space<smem>>, %arg4: memref<1x2x16xf32, #tpu.memory_space<vmem>>, %arg5: memref<1x2x2xi32, #tpu.memory_space<vmem>>, %arg6: memref<1x2x1xf32, #tpu.memory_space<vmem>>, %arg7: memref<1x2x1xi32, #tpu.memory_space<vmem>>) attributes {dimension_semantics = [#tpu.dimension_semantics<parallel>], iteration_bounds = array<i64: 1>, scalar_prefetch = 0 : i64, scratch_operands = 0 : i64, tpu.core_type = #tpu.core_type<tc>, window_params = [{transform_indices = @transform_0, window_bounds = array<i64: 2, 16, 32>}, {pipeline_mode = #tpu.pipeline_mode<synchronous>, transform_indices = @transform_1, window_bounds = array<i64: 32, 2>}, {transform_indices = @transform_2, window_bounds = array<i64: 1, 2>}, {transform_indices = @transform_3, window_bounds = array<i64: 1, 2, 16>}, {transform_indices = @transform_4, window_bounds = array<i64: 1, 2, 2>}, {transform_indices = @transform_5, window_bounds = array<i64: 1, 2, 1>}, {transform_indices = @transform_6, window_bounds = array<i64: 1, 2, 1>}]} {
    %c0 = arith.constant 0 : index
    %c0_0 = arith.constant 0 : index
    %c0_1 = arith.constant 0 : index
    %0 = vector.load %arg1[%c0, %c0_0, %c0_1] : memref<2x16x32xf32, #tpu.memory_space<vmem>>, vector<2x16x32xf32>
    %1 = vector.shape_cast %0 : vector<2x16x32xf32> to vector<32x32xf32>
    %c0_2 = arith.constant 0 : index
    %c0_3 = arith.constant 0 : index
    %2 = vector.load %arg2[%c0_2, %c0_3] : memref<32x2xf32, #tpu.memory_space<vmem>>, vector<32x2xf32>
    %cst = arith.constant dense<0.000000e+00> : vector<32x2xf32>
    %3 = tpu.matmul %1, %2, %cst {dimension_numbers = #tpu.dot_dimension_numbers<[1], [0], [0], [1], [0, 0, 1, 1], [], []>} : vector<32x32xf32>, vector<32x2xf32>, vector<32x2xf32> -> vector<32x2xf32>
    %4 = vector.shape_cast %3 : vector<32x2xf32> to vector<2x16x2xf32>
    %5 = vector.extract_strided_slice %4 {offsets = [0, 0, 0], sizes = [2, 16, 1], strides = [1, 1, 1]} : vector<2x16x2xf32> to vector<2x16x1xf32>
    %6 = vector.shape_cast %5 : vector<2x16x1xf32> to vector<2x16xf32>
    %c0_4 = arith.constant 0 : index
    %c0_5 = arith.constant 0 : index
    %7 = memref.load %arg3[%c0_4, %c0_5] : memref<1x2xf32, #tpu.memory_space<smem>>
    %8 = vector.broadcast %7 : f32 to vector<2x16xf32>
    %9 = arith.addf %6, %8 : vector<2x16xf32>
    %10 = vector.extract_strided_slice %4 {offsets = [0, 0, 1], sizes = [2, 16, 1], strides = [1, 1, 1]} : vector<2x16x2xf32> to vector<2x16x1xf32>
    %11 = vector.shape_cast %10 : vector<2x16x1xf32> to vector<2x16xf32>
    %c0_6 = arith.constant 0 : index
    %c1 = arith.constant 1 : index
    %12 = memref.load %arg3[%c0_6, %c1] : memref<1x2xf32, #tpu.memory_space<smem>>
    %13 = vector.broadcast %12 : f32 to vector<2x16xf32>
    %14 = arith.addf %11, %13 : vector<2x16xf32>
    %c0_7 = arith.constant 0 : index
    %c0_8 = arith.constant 0 : index
    %c0_9 = arith.constant 0 : index
    %15 = vector.load %arg4[%c0_7, %c0_8, %c0_9] : memref<1x2x16xf32, #tpu.memory_space<vmem>>, vector<1x2x16xf32>
    %16 = vector.shape_cast %15 : vector<1x2x16xf32> to vector<2x16xf32>
    %c0_10 = arith.constant 0 : index
    %c0_11 = arith.constant 0 : index
    %c0_12 = arith.constant 0 : index
    %17 = vector.load %arg5[%c0_10, %c0_11, %c0_12] : memref<1x2x2xi32, #tpu.memory_space<vmem>>, vector<1x2x2xi32>
    %18 = vector.shape_cast %17 : vector<1x2x2xi32> to vector<2x2xi32>
    %cst_13 = arith.constant 1.401300e-45 : f32
    %19 = vector.broadcast %cst_13 : f32 to vector<2x16xf32>
    %20 = arith.addf %16, %19 : vector<2x16xf32>
    %21 = math.log %20 : vector<2x16xf32>
    %22 = arith.addf %9, %21 : vector<2x16xf32>
    %cst_14 = arith.constant dense<0xFF800000> : vector<2xf32>
    %23 = vector.multi_reduction <maximumf>, %22, %cst_14 [1] : vector<2x16xf32> to vector<2xf32>
    %24 = vector.shape_cast %23 : vector<2xf32> to vector<2x1xf32>
    %25 = vector.broadcast %24 : vector<2x1xf32> to vector<2x16xf32>
    %26 = arith.subf %22, %25 : vector<2x16xf32>
    %27 = math.exp %26 : vector<2x16xf32>
    %cst_15 = arith.constant dense<0.000000e+00> : vector<2xf32>
    %28 = vector.multi_reduction <add>, %27, %cst_15 [1] : vector<2x16xf32> to vector<2xf32>
    %29 = vector.shape_cast %28 : vector<2xf32> to vector<2x1xf32>
    %30 = math.log %29 : vector<2x1xf32>
    %31 = arith.addf %30, %24 : vector<2x1xf32>
    %32 = vector.broadcast %31 : vector<2x1xf32> to vector<2x16xf32>
    %33 = arith.subf %22, %32 : vector<2x16xf32>
    %34 = arith.addf %14, %21 : vector<2x16xf32>
    %cst_16 = arith.constant dense<0xFF800000> : vector<2xf32>
    %35 = vector.multi_reduction <maximumf>, %34, %cst_16 [1] : vector<2x16xf32> to vector<2xf32>
    %36 = vector.shape_cast %35 : vector<2xf32> to vector<2x1xf32>
    %37 = vector.broadcast %36 : vector<2x1xf32> to vector<2x16xf32>
    %38 = arith.subf %34, %37 : vector<2x16xf32>
    %39 = math.exp %38 : vector<2x16xf32>
    %cst_17 = arith.constant dense<0.000000e+00> : vector<2xf32>
    %40 = vector.multi_reduction <add>, %39, %cst_17 [1] : vector<2x16xf32> to vector<2xf32>
    %41 = vector.shape_cast %40 : vector<2xf32> to vector<2x1xf32>
    %42 = math.log %41 : vector<2x1xf32>
    %43 = arith.addf %42, %36 : vector<2x1xf32>
    %44 = vector.broadcast %43 : vector<2x1xf32> to vector<2x16xf32>
    %45 = arith.subf %34, %44 : vector<2x16xf32>
    %cst_18 = arith.constant 5.000000e-01 : f32
    %46 = vector.broadcast %cst_18 : f32 to vector<2x16xf32>
    %47 = arith.cmpf ogt, %16, %46 : vector<2x16xf32>
    %cst_19 = arith.constant -1.000000e+07 : f32
    %48 = vector.broadcast %cst_19 : f32 to vector<2x16xf32>
    %49 = arith.select %47, %9, %48 : vector<2x16xi1>, vector<2x16xf32>
    %cst_20 = arith.constant 5.000000e-01 : f32
    %50 = vector.broadcast %cst_20 : f32 to vector<2x16xf32>
    %51 = arith.cmpf ogt, %16, %50 : vector<2x16xf32>
    %cst_21 = arith.constant -1.000000e+07 : f32
    %52 = vector.broadcast %cst_21 : f32 to vector<2x16xf32>
    %53 = arith.select %51, %14, %52 : vector<2x16xi1>, vector<2x16xf32>
    %54 = tpu.iota {dimensions = array<i32: 1>} : vector<2x16xi32>
    %cst_22 = arith.constant 0xFF800000 : f32
    %55 = vector.broadcast %cst_22 : f32 to vector<2x1xf32>
    %56 = vector.extract_strided_slice %53 {offsets = [0, 1], sizes = [2, 15], strides = [1, 1]} : vector<2x16xf32> to vector<2x15xf32>
    %57 = tpu.concatenate %56, %55 in 1 : vector<2x15xf32>, vector<2x1xf32> -> vector<2x16xf32>
    %58 = arith.maximumf %53, %57 : vector<2x16xf32>
    %cst_23 = arith.constant 0xFF800000 : f32
    %59 = vector.broadcast %cst_23 : f32 to vector<2x2xf32>
    %60 = vector.extract_strided_slice %58 {offsets = [0, 2], sizes = [2, 14], strides = [1, 1]} : vector<2x16xf32> to vector<2x14xf32>
    %61 = tpu.concatenate %60, %59 in 1 : vector<2x14xf32>, vector<2x2xf32> -> vector<2x16xf32>
    %62 = arith.maximumf %58, %61 : vector<2x16xf32>
    %cst_24 = arith.constant 0xFF800000 : f32
    %63 = vector.broadcast %cst_24 : f32 to vector<2x4xf32>
    %64 = vector.extract_strided_slice %62 {offsets = [0, 4], sizes = [2, 12], strides = [1, 1]} : vector<2x16xf32> to vector<2x12xf32>
    %65 = tpu.concatenate %64, %63 in 1 : vector<2x12xf32>, vector<2x4xf32> -> vector<2x16xf32>
    %66 = arith.maximumf %62, %65 : vector<2x16xf32>
    %cst_25 = arith.constant 0xFF800000 : f32
    %67 = vector.broadcast %cst_25 : f32 to vector<2x8xf32>
    %68 = vector.extract_strided_slice %66 {offsets = [0, 8], sizes = [2, 8], strides = [1, 1]} : vector<2x16xf32> to vector<2x8xf32>
    %69 = tpu.concatenate %68, %67 in 1 : vector<2x8xf32>, vector<2x8xf32> -> vector<2x16xf32>
    %70 = arith.maximumf %66, %69 : vector<2x16xf32>
    %71 = arith.addf %49, %70 : vector<2x16xf32>
    %cst_26 = arith.constant dense<0xFF800000> : vector<2xf32>
    %72 = vector.multi_reduction <maximumf>, %71, %cst_26 [1] : vector<2x16xf32> to vector<2xf32>
    %73 = vector.shape_cast %72 : vector<2xf32> to vector<2x1xf32>
    %74 = vector.broadcast %73 : vector<2x1xf32> to vector<2x16xf32>
    %75 = arith.cmpf oeq, %71, %74 : vector<2x16xf32>
    %c16_i32 = arith.constant 16 : i32
    %76 = vector.broadcast %c16_i32 : i32 to vector<2x16xi32>
    %77 = arith.select %75, %54, %76 : vector<2x16xi1>, vector<2x16xi32>
    %cst_27 = arith.constant dense<2147483647> : vector<2xi32>
    %78 = vector.multi_reduction <minsi>, %77, %cst_27 [1] : vector<2x16xi32> to vector<2xi32>
    %79 = vector.shape_cast %78 : vector<2xi32> to vector<2x1xi32>
    %80 = vector.broadcast %79 : vector<2x1xi32> to vector<2x16xi32>
    %81 = arith.cmpi eq, %54, %80 : vector<2x16xi32>
    %cst_28 = arith.constant 0xFF800000 : f32
    %82 = vector.broadcast %cst_28 : f32 to vector<2x16xf32>
    %83 = arith.select %81, %70, %82 : vector<2x16xi1>, vector<2x16xf32>
    %cst_29 = arith.constant dense<0xFF800000> : vector<2xf32>
    %84 = vector.multi_reduction <maximumf>, %83, %cst_29 [1] : vector<2x16xf32> to vector<2xf32>
    %85 = vector.shape_cast %84 : vector<2xf32> to vector<2x1xf32>
    %86 = vector.broadcast %79 : vector<2x1xi32> to vector<2x16xi32>
    %87 = arith.cmpi sge, %54, %86 : vector<2x16xi32>
    %88 = vector.broadcast %85 : vector<2x1xf32> to vector<2x16xf32>
    %89 = arith.cmpf oeq, %53, %88 : vector<2x16xf32>
    %90 = arith.andi %87, %89 : vector<2x16xi1>
    %c16_i32_30 = arith.constant 16 : i32
    %91 = vector.broadcast %c16_i32_30 : i32 to vector<2x16xi32>
    %92 = arith.select %90, %54, %91 : vector<2x16xi1>, vector<2x16xi32>
    %cst_31 = arith.constant dense<2147483647> : vector<2xi32>
    %93 = vector.multi_reduction <minsi>, %92, %cst_31 [1] : vector<2x16xi32> to vector<2xi32>
    %94 = vector.shape_cast %93 : vector<2xi32> to vector<2x1xi32>
    %c16_i32_32 = arith.constant 16 : i32
    %95 = vector.broadcast %c16_i32_32 : i32 to vector<2x1xi32>
    %96 = arith.muli %79, %95 : vector<2x1xi32>
    %97 = arith.addi %96, %94 : vector<2x1xi32>
    %c0_33 = arith.constant 0 : index
    %c0_34 = arith.constant 0 : index
    %c0_35 = arith.constant 0 : index
    %98 = vector.load %arg7[%c0_33, %c0_34, %c0_35] : memref<1x2x1xi32, #tpu.memory_space<vmem>>, vector<1x2x1xi32>
    %99 = vector.shape_cast %98 : vector<1x2x1xi32> to vector<2x1xi32>
    %100 = vector.shape_cast %97 : vector<2x1xi32> to vector<1x2x1xi32>
    tpu.vector_store %arg7[%c0_33, %c0_34, %c0_35], %100 {strides = array<i32>} : memref<1x2x1xi32, #tpu.memory_space<vmem>>, vector<1x2x1xi32>,
    %101 = vector.extract_strided_slice %18 {offsets = [0, 0], sizes = [2, 1], strides = [1, 1]} : vector<2x2xi32> to vector<2x1xi32>
    %102 = vector.broadcast %101 : vector<2x1xi32> to vector<2x16xi32>
    %103 = arith.cmpi eq, %54, %102 : vector<2x16xi32>
    %cst_36 = arith.constant 0.000000e+00 : f32
    %104 = vector.broadcast %cst_36 : f32 to vector<2x16xf32>
    %105 = arith.select %103, %33, %104 : vector<2x16xi1>, vector<2x16xf32>
    %cst_37 = arith.constant dense<0.000000e+00> : vector<2xf32>
    %106 = vector.multi_reduction <add>, %105, %cst_37 [1] : vector<2x16xf32> to vector<2xf32>
    %107 = vector.shape_cast %106 : vector<2xf32> to vector<2x1xf32>
    %108 = vector.extract_strided_slice %18 {offsets = [0, 1], sizes = [2, 1], strides = [1, 1]} : vector<2x2xi32> to vector<2x1xi32>
    %109 = vector.broadcast %108 : vector<2x1xi32> to vector<2x16xi32>
    %110 = arith.cmpi eq, %54, %109 : vector<2x16xi32>
    %cst_38 = arith.constant 0.000000e+00 : f32
    %111 = vector.broadcast %cst_38 : f32 to vector<2x16xf32>
    %112 = arith.select %110, %45, %111 : vector<2x16xi1>, vector<2x16xf32>
    %cst_39 = arith.constant dense<0.000000e+00> : vector<2xf32>
    %113 = vector.multi_reduction <add>, %112, %cst_39 [1] : vector<2x16xf32> to vector<2xf32>
    %114 = vector.shape_cast %113 : vector<2xf32> to vector<2x1xf32>
    %115 = vector.extract_strided_slice %18 {offsets = [0, 0], sizes = [2, 1], strides = [1, 1]} : vector<2x2xi32> to vector<2x1xi32>
    %c-1_i32 = arith.constant -1 : i32
    %116 = vector.broadcast %c-1_i32 : i32 to vector<2x1xi32>
    %117 = arith.cmpi ne, %115, %116 : vector<2x1xi32>
    %118 = arith.addf %107, %114 : vector<2x1xf32>
    %cst_40 = arith.constant 0.000000e+00 : f32
    %119 = vector.broadcast %cst_40 : f32 to vector<2x1xf32>
    %120 = arith.subf %119, %118 : vector<2x1xf32>
    %cst_41 = arith.constant 0.000000e+00 : f32
    %121 = vector.broadcast %cst_41 : f32 to vector<2x1xf32>
    %122 = arith.select %117, %120, %121 : vector<2x1xi1>, vector<2x1xf32>
    %c0_42 = arith.constant 0 : index
    %c0_43 = arith.constant 0 : index
    %c0_44 = arith.constant 0 : index
    %123 = vector.load %arg6[%c0_42, %c0_43, %c0_44] : memref<1x2x1xf32, #tpu.memory_space<vmem>>, vector<1x2x1xf32>
    %124 = vector.shape_cast %123 : vector<1x2x1xf32> to vector<2x1xf32>
    %125 = vector.shape_cast %122 : vector<2x1xf32> to vector<1x2x1xf32>
    tpu.vector_store %arg6[%c0_42, %c0_43, %c0_44], %125 {strides = array<i32>} : memref<1x2x1xf32, #tpu.memory_space<vmem>>, vector<1x2x1xf32>,
    return
  }
  func.func @transform_0(%arg0: i32) -> (i32, i32, i32) {
    %c0_i32 = arith.constant 0 : i32
    %c0_i32_0 = arith.constant 0 : i32
    %c0_i32_1 = arith.constant 0 : i32
    return %arg0, %c0_i32, %c0_i32_0 : i32, i32, i32
  }
  func.func @transform_1(%arg0: i32) -> (i32, i32) {
    %c0_i32 = arith.constant 0 : i32
    %c0_i32_0 = arith.constant 0 : i32
    %c0_i32_1 = arith.constant 0 : i32
    return %c0_i32, %c0_i32_0 : i32, i32
  }
  func.func @transform_2(%arg0: i32) -> (i32, i32) {
    %c0_i32 = arith.constant 0 : i32
    %c0_i32_0 = arith.constant 0 : i32
    %c0_i32_1 = arith.constant 0 : i32
    return %c0_i32, %c0_i32_0 : i32, i32
  }
  func.func @transform_3(%arg0: i32) -> (i32, i32, i32) {
    %c0_i32 = arith.constant 0 : i32
    %c0_i32_0 = arith.constant 0 : i32
    %c0_i32_1 = arith.constant 0 : i32
    return %arg0, %c0_i32, %c0_i32_0 : i32, i32, i32
  }
  func.func @transform_4(%arg0: i32) -> (i32, i32, i32) {
    %c0_i32 = arith.constant 0 : i32
    %c0_i32_0 = arith.constant 0 : i32
    %c0_i32_1 = arith.constant 0 : i32
    return %arg0, %c0_i32, %c0_i32_0 : i32, i32, i32
  }
  func.func @transform_5(%arg0: i32) -> (i32, i32, i32) {
    %c0_i32 = arith.constant 0 : i32
    %c0_i32_0 = arith.constant 0 : i32
    %c0_i32_1 = arith.constant 0 : i32
    return %arg0, %c0_i32, %c0_i32_0 : i32, i32, i32
  }
  func.func @transform_6(%arg0: i32) -> (i32, i32, i32) {
    %c0_i32 = arith.constant 0 : i32
    %c0_i32_0 = arith.constant 0 : i32
    %c0_i32_1 = arith.constant 0 : i32
    return %arg0, %c0_i32, %c0_i32_0 : i32, i32, i32
  }
}

</mosaic_0001>

<llo_original>
// kernel: tpu_custom_call.1
$region0: #{tpu_custom_call.1}
  #allocation0 [shape = 'u32[]', space=smem, size = 0x4, offset = 0x4, fixed_abs, tag = 'smem constant byte address 0x4 - core index']
  #allocation1 [shape = 'u32[72,128]{1,0:T(1,128)}', space=vmem, size = 0x9000, scoped, tag = 'internal scratch']
  %s0 = inlined_call_operand.vmem [shape: f32[2,16,32], index: 0, kind: input, shape index: {}]
  %s1 = inlined_call_operand.vmem [shape: f32[32,2], index: 1, kind: input, shape index: {}]
  %s2 = inlined_call_operand.hbm [shape: f32[1,2], index: 2, kind: input, shape index: {}]
  %s3 = inlined_call_operand.vmem [shape: f32[1,2,16], index: 3, kind: input, shape index: {}]
  %s4 = inlined_call_operand.vmem [shape: s32[1,2,2], index: 4, kind: input, shape index: {}]
  %s5 = inlined_call_operand.vmem [shape: f32[1,2,1], index: 5, kind: output, shape index: {0}]
  %s6 = inlined_call_operand.vmem [shape: s32[1,2,1], index: 6, kind: output, shape index: {1}]
  %7 = xla_tuple %s5, %s6
  %s8 = sld [smem:[#allocation0]]
  $region42: #{tpu_custom_call.1} parent=0
    _
  %s10 = ssub.s32 1, %s8
  %s11 = scalar_select 0, %s10, %s8
  $region1: #{tpu_custom_call.1} parent=0
    #allocation2 [shape = 'u8[512]{0}', space=smem, size = 0x200, scoped, tag = 'input window, operand 2, single buffered']
    #allocation3 [shape = 's32[1]{0}', space=sflag, size = 0x4, scoped, tag = 'scoped memory for tpu_custom_call.1']
    %12 = vsyncpa [#allocation3], 0
    // Predicated region
    $region2: #{tpu_custom_call.1} parent=1 // pred_check
      _
    $region3: #{tpu_custom_call.1} parent=1 // pred_check_branch
      %14 = sbr.rel (0) target = $region5
    $region4: #{tpu_custom_call.1} parent=1 // pred_region
      _
    $region5: #{tpu_custom_call.1} parent=1 // pred_fallthru
      _
    // Predicated region
    $region6: #{tpu_custom_call.1} parent=1 // pred_check
      _
    $region7: #{tpu_custom_call.1} parent=1 // pred_check_branch
      %16 = sbr.rel (0) target = $region9
    $region8: #{tpu_custom_call.1} parent=1 // pred_region
      _
    $region9: #{tpu_custom_call.1} parent=1 // pred_fallthru
      _
    // Predicated region
    $region10: #{tpu_custom_call.1} parent=1 // pred_check
      _
    $region11: #{tpu_custom_call.1} parent=1 // pred_check_branch
      %18 = sbr.rel (0) target = $region13
    $region12: #{tpu_custom_call.1} parent=1 // pred_region
      %20 = vsyncadd [#allocation3], 0
      %s22 = sshll.u32 %s2, 4
      %s23 = int_to_ptr.hbm [resolvable:$true] %s22
      %25 = dma.hbm_to_smem %s23, 16, [#allocation2], [#allocation3]
    $region13: #{tpu_custom_call.1} parent=1 // pred_fallthru
      _
    // Predicated region
    $region14: #{tpu_custom_call.1} parent=1 // pred_check
      _
    $region15: #{tpu_custom_call.1} parent=1 // pred_check_branch
      %27 = sbr.rel (0) target = $region17
    $region16: #{tpu_custom_call.1} parent=1 // pred_region
      _
    $region17: #{tpu_custom_call.1} parent=1 // pred_fallthru
      _
    // Predicated region
    $region18: #{tpu_custom_call.1} parent=1 // pred_check
      _
    $region19: #{tpu_custom_call.1} parent=1 // pred_check_branch
      %29 = sbr.rel (0) target = $region21
    $region20: #{tpu_custom_call.1} parent=1 // pred_region
      _
    $region21: #{tpu_custom_call.1} parent=1 // pred_fallthru
      _
    // Predicated region
    $region22: #{tpu_custom_call.1} parent=1 // pred_check
      _
    $region23: #{tpu_custom_call.1} parent=1 // pred_check_branch
      %31 = sbr.rel (0) target = $region25
    $region24: #{tpu_custom_call.1} parent=1 // pred_region
      %33 = dma.done [#allocation3], 16
    $region25: #{tpu_custom_call.1} parent=1 // pred_fallthru
      _
    %34 = sfence
    %v35 = vld [vmem:[%s0] sm:$0xff]
    %v36 = vld [vmem:[%s0 + $0x8] sm:$0xff]
    %v37 = vld [vmem:[%s0 + $0x10] sm:$0xff]
    %v38 = vld [vmem:[%s0 + $0x18] sm:$0xff]
    %v39 = vld [vmem:[%s1] sm:$0xff]
    %v40 = vld [vmem:[%s1 + $0x8] sm:$0xff]
    %v41 = vld [vmem:[%s1 + $0x10] sm:$0xff]
    %v42 = vld [vmem:[%s1 + $0x18] sm:$0xff]
    %vm43 = vcmask 261120
    %v45 = vsel %vm43, %v35, 0
    %v48 = vsel %vm43, %v36, 0
    %v51 = vsel %vm43, %v37, 0
    %v54 = vsel %vm43, %v38, 0
    %56 = vmatpush.msra.mxu0 0.0
    %57 = vmatpush.msra.mxu0 0.0
    %58 = vmatpush.msra.mxu0 0.0
    %59 = vmatpush.msra.mxu0 0.0
    %60 = vmatpush.msra.mxu0 0.0
    %61 = vmatpush.msra.mxu0 0.0
    %62 = vmatpush.msra.mxu0 0.0
    %63 = vmatpush.msra.mxu0 0.0
    %64 = vmatpush.msra.mxu0 0.0
    %65 = vmatpush.msra.mxu0 0.0
    %66 = vmatpush.msra.mxu0 0.0
    %67 = vmatpush.msra.mxu0 0.0
    %68 = vmatpush.msra.mxu0 %v42
    %69 = vmatpush.msra.mxu0 %v41
    %70 = vmatpush.msra.mxu0 %v40
    %71 = vmatpush.msra.mxu0 %v39
    %72 = vmatmul.f32.gmra.mxu0 %v45
    %v73 = vpop.f32.mrf.mxu0
    %v74 = vadd.f32 0.0, %v73
    %75 = vmatmul.f32.gmra.mxu0 %v48
    %v76 = vpop.f32.mrf.mxu0
    %v77 = vadd.f32 0.0, %v76
    %78 = vmatmul.f32.gmra.mxu0 %v51
    %v79 = vpop.f32.mrf.mxu0
    %v80 = vadd.f32 0.0, %v79
    %81 = vmatmul.f32.gmra.mxu0 %v54
    %v82 = vpop.f32.mrf.mxu0
    %v83 = vadd.f32 0.0, %v82
    %84 = vdwg.mxu0
    %s85 = sld [smem:[#allocation2]]
    %v86 = vstv %s85
    %v87 = vadd.f32 %v74, %v86
    %v88 = vadd.f32 %v77, %v86
    %v89 = vadd.f32 %v80, %v86
    %v90 = vadd.f32 %v83, %v86
    %s91 = sld [smem:[#allocation2 + $0x1]]
    %v92 = vstv %s91
    %v93 = vadd.f32 %v74, %v92
    %v94 = vadd.f32 %v77, %v92
    %v95 = vadd.f32 %v80, %v92
    %v96 = vadd.f32 %v83, %v92
    %v97 = vld [vmem:[%s3] sm:$0x3]
    %v98 = vld [vmem:[%s4] sm:$0x3]
    %v99 = vadd.f32 %v97, 1e-45
    %v100 = vlog2.pop %v99
    %v101 = vmul.f32 %v100, 0.6931472
    %v103 = vperm.slane %v101, 0
    %v104 = vlaneseq
    %v105 = vshrl.u32 %v104, 7
    %107 = vset.pattern.permute.xlu0 %v105
    %108 = vperm.xlu0 %107, %v103
    %v109 = vpop.permute.xlu0 %108
    %v110 = vlaneseq
    %v111 = vshrl.u32 %v110, 7
    %v112 = vadd.s32 %v111, 8
    %113 = vset.pattern.permute.xlu0 %v112
    %114 = vperm.xlu0 %113, %v103
    %v115 = vpop.permute.xlu0 %114
    %v116 = vperm.slane %v101, 1
    %v117 = vlaneseq
    %v118 = vshrl.u32 %v117, 7
    %120 = vset.pattern.permute.xlu0 %v118
    %121 = vperm.xlu0 %120, %v116
    %v122 = vpop.permute.xlu0 %121
    %v123 = vlaneseq
    %v124 = vshrl.u32 %v123, 7
    %v125 = vadd.s32 %v124, 8
    %126 = vset.pattern.permute.xlu0 %v125
    %127 = vperm.xlu0 %126, %v116
    %v128 = vpop.permute.xlu0 %127
    %v133 = vadd.f32 %v87, %v109
    %v134 = vadd.f32 %v88, %v115
    %v135 = vadd.f32 %v89, %v122
    %v136 = vadd.f32 %v90, %v128
    %141 = vset.pattern.permute.xlu0 0
    %142 = vperm.xlu0 %141, %v133
    %v143 = vpop.permute.xlu0 %142
    %144 = vset.pattern.permute.xlu0 0
    %145 = vperm.xlu0 %144, %v134
    %v146 = vpop.permute.xlu0 %145
    %147 = vset.pattern.permute.xlu0 0
    %148 = vperm.xlu0 %147, %v135
    %v149 = vpop.permute.xlu0 %148
    %150 = vset.pattern.permute.xlu0 0
    %151 = vperm.xlu0 %150, %v136
    %v152 = vpop.permute.xlu0 %151
    %v153 = vlaneseq
    %v154 = vand.u32 %v153, 127
    %v155 = vperm.slane %v143, %v154
    %v156 = vadd.s32 %v154, 4294967288
    %v157 = vperm.slane %v146, %v156
    %vm158 = vcmask 130112
    %v159 = vsel %vm158, %v157, %v155
    %v160 = vperm.slane %v149, %v154
    %v161 = vperm.slane %v152, %v156
    %v162 = vsel %vm158, %v161, %v160
    %vm163 = vcmask 1041409
    %v164 = vsel %vm163, %v162, %v159
    %vm166 = vcmask 123904
    %v167 = vsel %vm166, %v164, -inf
    %168 = vmax.xlane.f32.xlu0 %v167
    %v169 = vpop.xlane.xlu0 %168
    %v171 = vperm.slane %v169, 0
    %v172 = vperm.slane %v169, 1
    %v175 = vsub.f32 %v133, %v171
    %v176 = vsub.f32 %v134, %v171
    %v177 = vsub.f32 %v135, %v172
    %v178 = vsub.f32 %v136, %v172
    %v179 = vmul.f32 %v175, 1.442695
    %v180 = vpow.pop %v179
    %v181 = vmul.f32 %v176, 1.442695
    %v182 = vpow.pop %v181
    %v183 = vmul.f32 %v177, 1.442695
    %v184 = vpow.pop %v183
    %v185 = vmul.f32 %v178, 1.442695
    %v186 = vpow.pop %v185
    %191 = vset.pattern.permute.xlu0 0
    %192 = vperm.xlu0 %191, %v180
    %v193 = vpop.permute.xlu0 %192
    %194 = vset.pattern.permute.xlu0 0
    %195 = vperm.xlu0 %194, %v182
    %v196 = vpop.permute.xlu0 %195
    %197 = vset.pattern.permute.xlu0 0
    %198 = vperm.xlu0 %197, %v184
    %v199 = vpop.permute.xlu0 %198
    %200 = vset.pattern.permute.xlu0 0
    %201 = vperm.xlu0 %200, %v186
    %v202 = vpop.permute.xlu0 %201
    %v203 = vperm.slane %v193, %v154
    %v204 = vperm.slane %v196, %v156
    %v205 = vsel %vm158, %v204, %v203
    %v206 = vperm.slane %v199, %v154
    %v207 = vperm.slane %v202, %v156
    %v208 = vsel %vm158, %v207, %v206
    %v209 = vsel %vm163, %v208, %v205
    %v211 = vsel %vm166, %v209, 0.0
    %212 = vadd.xlane.f32.xlu0 %v211
    %v213 = vpop.xlane.xlu0 %212
    %v214 = vlog2.pop %v213
    %v215 = vmul.f32 %v214, 0.6931472
    %v216 = vadd.f32 %v215, %v169
    %v218 = vperm.slane %v216, 0
    %v219 = vperm.slane %v216, 1
    %v222 = vsub.f32 %v133, %v218
    %v223 = vsub.f32 %v134, %v218
    %v224 = vsub.f32 %v135, %v219
    %v225 = vsub.f32 %v136, %v219
    %v226 = vadd.f32 %v93, %v109
    %v227 = vadd.f32 %v94, %v115
    %v228 = vadd.f32 %v95, %v122
    %v229 = vadd.f32 %v96, %v128
    %234 = vset.pattern.permute.xlu0 1
    %235 = vperm.xlu0 %234, %v226
    %v236 = vpop.permute.xlu0 %235
    %237 = vset.pattern.permute.xlu0 1
    %238 = vperm.xlu0 %237, %v227
    %v239 = vpop.permute.xlu0 %238
    %240 = vset.pattern.permute.xlu0 1
    %241 = vperm.xlu0 %240, %v228
    %v242 = vpop.permute.xlu0 %241
    %243 = vset.pattern.permute.xlu0 1
    %244 = vperm.xlu0 %243, %v229
    %v245 = vpop.permute.xlu0 %244
    %v246 = vperm.slane %v236, %v154
    %v247 = vperm.slane %v239, %v156
    %v248 = vsel %vm158, %v247, %v246
    %v249 = vperm.slane %v242, %v154
    %v250 = vperm.slane %v245, %v156
    %v251 = vsel %vm158, %v250, %v249
    %v252 = vsel %vm163, %v251, %v248
    %v254 = vsel %vm166, %v252, -inf
    %255 = vmax.xlane.f32.xlu0 %v254
    %v256 = vpop.xlane.xlu0 %255
    %v258 = vperm.slane %v256, 0
    %v259 = vperm.slane %v256, 1
    %v262 = vsub.f32 %v226, %v258
    %v263 = vsub.f32 %v227, %v258
    %v264 = vsub.f32 %v228, %v259
    %v265 = vsub.f32 %v229, %v259
    %v266 = vmul.f32 %v262, 1.442695
    %v267 = vpow.pop %v266
    %v268 = vmul.f32 %v263, 1.442695
    %v269 = vpow.pop %v268
    %v270 = vmul.f32 %v264, 1.442695
    %v271 = vpow.pop %v270
    %v272 = vmul.f32 %v265, 1.442695
    %v273 = vpow.pop %v272
    %278 = vset.pattern.permute.xlu0 1
    %279 = vperm.xlu0 %278, %v267
    %v280 = vpop.permute.xlu0 %279
    %281 = vset.pattern.permute.xlu0 1
    %282 = vperm.xlu0 %281, %v269
    %v283 = vpop.permute.xlu0 %282
    %284 = vset.pattern.permute.xlu0 1
    %285 = vperm.xlu0 %284, %v271
    %v286 = vpop.permute.xlu0 %285
    %287 = vset.pattern.permute.xlu0 1
    %288 = vperm.xlu0 %287, %v273
    %v289 = vpop.permute.xlu0 %288
    %v290 = vperm.slane %v280, %v154
    %v291 = vperm.slane %v283, %v156
    %v292 = vsel %vm158, %v291, %v290
    %v293 = vperm.slane %v286, %v154
    %v294 = vperm.slane %v289, %v156
    %v295 = vsel %vm158, %v294, %v293
    %v296 = vsel %vm163, %v295, %v292
    %v298 = vsel %vm166, %v296, 0.0
    %299 = vadd.xlane.f32.xlu0 %v298
    %v300 = vpop.xlane.xlu0 %299
    %v301 = vlog2.pop %v300
    %v302 = vmul.f32 %v301, 0.6931472
    %v303 = vadd.f32 %v302, %v256
    %v305 = vperm.slane %v303, 0
    %v306 = vperm.slane %v303, 1
    %v309 = vsub.f32 %v226, %v305
    %v310 = vsub.f32 %v227, %v305
    %v311 = vsub.f32 %v228, %v306
    %v312 = vsub.f32 %v229, %v306
    %vm313 = vcmp.gt.f32.partialorder %v97, 0.5
    %318 = vset.pattern.permute.xlu0 0
    %319 = vperm.xlu0 %318, %v87
    %v320 = vpop.permute.xlu0 %319
    %321 = vset.pattern.permute.xlu0 0
    %322 = vperm.xlu0 %321, %v88
    %v323 = vpop.permute.xlu0 %322
    %324 = vset.pattern.permute.xlu0 0
    %325 = vperm.xlu0 %324, %v89
    %v326 = vpop.permute.xlu0 %325
    %327 = vset.pattern.permute.xlu0 0
    %328 = vperm.xlu0 %327, %v90
    %v329 = vpop.permute.xlu0 %328
    %v330 = vperm.slane %v320, %v154
    %v331 = vperm.slane %v323, %v156
    %v332 = vsel %vm158, %v331, %v330
    %v333 = vperm.slane %v326, %v154
    %v334 = vperm.slane %v329, %v156
    %v335 = vsel %vm158, %v334, %v333
    %v336 = vsel %vm163, %v335, %v332
    %v338 = vsel %vm313, %v336, -10000000.0
    %343 = vset.pattern.permute.xlu0 1
    %344 = vperm.xlu0 %343, %v93
    %v345 = vpop.permute.xlu0 %344
    %346 = vset.pattern.permute.xlu0 1
    %347 = vperm.xlu0 %346, %v94
    %v348 = vpop.permute.xlu0 %347
    %349 = vset.pattern.permute.xlu0 1
    %350 = vperm.xlu0 %349, %v95
    %v351 = vpop.permute.xlu0 %350
    %352 = vset.pattern.permute.xlu0 1
    %353 = vperm.xlu0 %352, %v96
    %v354 = vpop.permute.xlu0 %353
    %v355 = vperm.slane %v345, %v154
    %v356 = vperm.slane %v348, %v156
    %v357 = vsel %vm158, %v356, %v355
    %v358 = vperm.slane %v351, %v154
    %v359 = vperm.slane %v354, %v156
    %v360 = vsel %vm158, %v359, %v358
    %v361 = vsel %vm163, %v360, %v357
    %v363 = vsel %vm313, %v361, -10000000.0
    %365 = vrot.lane.b32.xlu0 %v363, 127
    %v366 = vpop.permute.xlu0 %365
    %vm368 = vcmask 121856
    %v369 = vsel %vm368, %v366, -inf
    %v370 = vmax.f32 %v363, %v369
    %372 = vrot.lane.b32.xlu0 %v370, 126
    %v373 = vpop.permute.xlu0 %372
    %vm375 = vcmask 113664
    %v376 = vsel %vm375, %v373, -inf
    %v377 = vmax.f32 %v370, %v376
    %379 = vrot.lane.b32.xlu0 %v377, 124
    %v380 = vpop.permute.xlu0 %379
    %vm382 = vcmask 97280
    %v383 = vsel %vm382, %v380, -inf
    %v384 = vmax.f32 %v377, %v383
    %386 = vrot.lane.b32.xlu0 %v384, 120
    %v387 = vpop.permute.xlu0 %386
    %vm389 = vcmask 64512
    %v390 = vsel %vm389, %v387, -inf
    %v391 = vmax.f32 %v384, %v390
    %v392 = vadd.f32 %v338, %v391
    %v393 = vsel %vm166, %v392, -inf
    %394 = vmax.xlane.f32.xlu0 %v393
    %v395 = vpop.xlane.xlu0 %394
    %vm396 = vcmp.eq.f32.partialorder %v392, %v395
    %v397 = vsel %vm396, %v154, 16
    %v398 = vsel %vm166, %v397, 2147483647
    %v399 = vand.u32 %v398, 65535
    %v400 = vshra.s32 %v398, 16
    %v401 = vcvt.s32.f32 %v399
    %v402 = vcvt.s32.f32 %v400
    %403 = vmin.xlane.f32.xlu0 %v402
    %v404 = vpop.xlane.xlu0 %403
    %vm405 = vcmp.eq.f32.partialorder %v402, %v404
    %v406 = vsel %vm405, %v401, inf
    %407 = vmin.xlane.f32.xlu0 %v406
    %v408 = vpop.xlane.xlu0 %407
    %v409 = vcvt.f32.s32 %v408
    %v410 = vcvt.f32.s32 %v404
    %v411 = vshll.u32 %v410, 16
    %v412 = vadd.s32 %v411, %v409
    %vm413 = vcmp.eq.s32.totalorder %v154, %v412
    %v414 = vsel %vm413, %v391, -inf
    %v415 = vsel %vm166, %v414, -inf
    %416 = vmax.xlane.f32.xlu0 %v415
    %v417 = vpop.xlane.xlu0 %416
    %vm418 = vcmp.ge.s32.totalorder %v154, %v412
    %vm419 = vcmp.eq.f32.partialorder %v363, %v417
    %vm420 = vmand %vm418, %vm419
    %v421 = vsel %vm420, %v154, 16
    %v422 = vsel %vm166, %v421, 2147483647
    %v423 = vand.u32 %v422, 65535
    %v424 = vshra.s32 %v422, 16
    %v425 = vcvt.s32.f32 %v423
    %v426 = vcvt.s32.f32 %v424
    %427 = vmin.xlane.f32.xlu0 %v426
    %v428 = vpop.xlane.xlu0 %427
    %vm429 = vcmp.eq.f32.partialorder %v426, %v428
    %v430 = vsel %vm429, %v425, inf
    %431 = vmin.xlane.f32.xlu0 %v430
    %v432 = vpop.xlane.xlu0 %431
    %v433 = vcvt.f32.s32 %v432
    %v434 = vcvt.f32.s32 %v428
    %v435 = vshll.u32 %v434, 16
    %v436 = vadd.s32 %v435, %v433
    %v437 = vmul.u32 %v412, 16
    %v438 = vadd.s32 %v437, %v436
    %vm439 = vcmask 1024
    %440 = vst.msk [vmem:[%s6] sm:$0x3] %vm439, %v438
    %441 = vset.pattern.permute.xlu0 0
    %442 = vperm.xlu0 %441, %v98
    %v443 = vpop.permute.xlu0 %442
    %vm444 = vcmp.eq.s32.totalorder %v154, %v443
    %449 = vset.pattern.permute.xlu0 0
    %450 = vperm.xlu0 %449, %v222
    %v451 = vpop.permute.xlu0 %450
    %452 = vset.pattern.permute.xlu0 0
    %453 = vperm.xlu0 %452, %v223
    %v454 = vpop.permute.xlu0 %453
    %455 = vset.pattern.permute.xlu0 0
    %456 = vperm.xlu0 %455, %v224
    %v457 = vpop.permute.xlu0 %456
    %458 = vset.pattern.permute.xlu0 0
    %459 = vperm.xlu0 %458, %v225
    %v460 = vpop.permute.xlu0 %459
    %v461 = vperm.slane %v451, %v154
    %v462 = vperm.slane %v454, %v156
    %v463 = vsel %vm158, %v462, %v461
    %v464 = vperm.slane %v457, %v154
    %v465 = vperm.slane %v460, %v156
    %v466 = vsel %vm158, %v465, %v464
    %v467 = vsel %vm163, %v466, %v463
    %v469 = vsel %vm444, %v467, 0.0
    %v470 = vsel %vm166, %v469, 0.0
    %471 = vadd.xlane.f32.xlu0 %v470
    %v472 = vpop.xlane.xlu0 %471
    %473 = vset.pattern.permute.xlu0 1
    %474 = vperm.xlu0 %473, %v98
    %v475 = vpop.permute.xlu0 %474
    %vm476 = vcmp.eq.s32.totalorder %v154, %v475
    %481 = vset.pattern.permute.xlu0 1
    %482 = vperm.xlu0 %481, %v309
    %v483 = vpop.permute.xlu0 %482
    %484 = vset.pattern.permute.xlu0 1
    %485 = vperm.xlu0 %484, %v310
    %v486 = vpop.permute.xlu0 %485
    %487 = vset.pattern.permute.xlu0 1
    %488 = vperm.xlu0 %487, %v311
    %v489 = vpop.permute.xlu0 %488
    %490 = vset.pattern.permute.xlu0 1
    %491 = vperm.xlu0 %490, %v312
    %v492 = vpop.permute.xlu0 %491
    %v493 = vperm.slane %v483, %v154
    %v494 = vperm.slane %v486, %v156
    %v495 = vsel %vm158, %v494, %v493
    %v496 = vperm.slane %v489, %v154
    %v497 = vperm.slane %v492, %v156
    %v498 = vsel %vm158, %v497, %v496
    %v499 = vsel %vm163, %v498, %v495
    %v501 = vsel %vm476, %v499, 0.0
    %v502 = vsel %vm166, %v501, 0.0
    %503 = vadd.xlane.f32.xlu0 %v502
    %v504 = vpop.xlane.xlu0 %503
    %vm505 = vcmp.ne.s32.totalorder %v98, 4294967295
    %v506 = vadd.f32 %v472, %v504
    %v507 = vsub.f32 0.0, %v506
    %v508 = vsel %vm505, %v507, 0.0
    %509 = vst.msk [vmem:[%s5] sm:$0x3] %vm439, %v508
    // Predicated region
    $region26: #{tpu_custom_call.1} parent=1 // pred_check
      _
    $region27: #{tpu_custom_call.1} parent=1 // pred_check_branch
      %511 = sbr.rel (0) target = $region29
    $region28: #{tpu_custom_call.1} parent=1 // pred_region
      _
    $region29: #{tpu_custom_call.1} parent=1 // pred_fallthru
      _
    // Predicated region
    $region30: #{tpu_custom_call.1} parent=1 // pred_check
      _
    $region31: #{tpu_custom_call.1} parent=1 // pred_check_branch
      %513 = sbr.rel (0) target = $region33
    $region32: #{tpu_custom_call.1} parent=1 // pred_region
      _
    $region33: #{tpu_custom_call.1} parent=1 // pred_fallthru
      _
    // Predicated region
    $region34: #{tpu_custom_call.1} parent=1 // pred_check
      _
    $region35: #{tpu_custom_call.1} parent=1 // pred_check_branch
      %515 = sbr.rel (0) target = $region37
    $region36: #{tpu_custom_call.1} parent=1 // pred_region
      _
    $region37: #{tpu_custom_call.1} parent=1 // pred_fallthru
      _
    // Predicated region
    $region38: #{tpu_custom_call.1} parent=1 // pred_check
      _
    $region39: #{tpu_custom_call.1} parent=1 // pred_check_branch
      %517 = sbr.rel (0) target = $region41
    $region40: #{tpu_custom_call.1} parent=1 // pred_region
      _
    $region41: #{tpu_custom_call.1} parent=1 // pred_fallthru
      _
    %518 = vsyncpa [#allocation3], 1

</llo_original>
